<compile_context>
chip_gen: v5e
topology: v5e:2x2
jax: 0.10.0
libtpu: 0.0.40
codegen_flags: <defaults>
</compile_context>

<pallas_src>
import jax
import jax.numpy as jnp
from jax.experimental import pallas as pl
from jax.experimental.pallas import tpu as pltpu


def _mm_kernel(choice_ref, w_ref, x_ref, o_ref):
    # choice_ref: SMEM scalar-prefetch array (only used in index_maps).
    # w_ref: (1, M, K) selected weight tile (VMEM-resident across the N grid axis).
    # x_ref: (K, TN) lane-dense column tile of x.
    # o_ref: (1, M, TN) lane-dense output tile.
    del choice_ref
    o_ref[0] = jnp.dot(
        w_ref[0], x_ref[...], preferred_element_type=jnp.float32
    ).astype(o_ref.dtype)


def param_mm_batched(w_stack, x, choice_idx, *, tn=512):
    """Compute w_stack[choice_idx[c]] @ x for every c in one pallas_call.

    w_stack: (n_weights, M, K) f32
    x:       (K, N) f32
    choice_idx: (C,) int32 indices into w_stack's leading axis
    returns: (C, M, N) f32
    """
    n_w, M, K = w_stack.shape
    K2, N = x.shape
    assert K == K2, f"inner dims mismatch: {K} vs {K2}"
    C = int(choice_idx.shape[0])

    # Lane-dense tiling of the N axis: 128-aligned, capped at 512 (f32 sweet spot).
    tn = max(128, min(tn, pl.cdiv(N, 128) * 128))
    n_pad = pl.cdiv(N, tn) * tn
    if n_pad != N:
        x = jnp.pad(x, ((0, 0), (0, n_pad - N)))

    grid = (C, n_pad // tn)

    out = pl.pallas_call(
        _mm_kernel,
        out_shape=jax.ShapeDtypeStruct((C, M, n_pad), x.dtype),
        grid_spec=pltpu.PrefetchScalarGridSpec(
            num_scalar_prefetch=1,
            grid=grid,
            in_specs=[
                # Weight: pick the slice named by the prefetched choice index; the
                # index_map ignores the N axis, so the (5,10) weight stays resident.
                pl.BlockSpec((1, M, K), lambda c, n, choice: (choice[c], 0, 0)),
                # x: (K, TN) lane-dense column tile, shared across choices.
                pl.BlockSpec((K, tn), lambda c, n, choice: (0, n)),
            ],
            out_specs=pl.BlockSpec((1, M, tn), lambda c, n, choice: (c, 0, n)),
        ),
        compiler_params=pltpu.CompilerParams(
            # Both axes are independent -> megacore sharding on v7x; harmless on v5e/v6e.
            dimension_semantics=("parallel", "parallel"),
        ),
    )(choice_idx, w_stack, x)

    return out[:, :, :N]


class MyModuleJax:
    """JAX/Pallas equivalent of the PyTorch MyModule (ParameterDict of two 5x10 mats)."""

    _CHOICES = {"left": 0, "right": 1}

    def __init__(self, key):
        k_left, k_right = jax.random.split(key)
        # torch.randn(5, 10) equivalents, deterministic.
        self.params = {
            "left": jax.random.normal(k_left, (5, 10), dtype=jnp.float32),
            "right": jax.random.normal(k_right, (5, 10), dtype=jnp.float32),
        }
        # Stacked weights: one tensor, one kernel, choice handled by scalar prefetch.
        self.w_stack = jnp.stack([self.params["left"], self.params["right"]], axis=0)

    def forward(self, x, choice):
        # Torch-identical semantics: self.params[choice].mm(x) -> (5, N).
        idx = jnp.array([self._CHOICES[choice]], dtype=jnp.int32)
        return param_mm_batched(self.w_stack, x, idx)[0]

    def forward_all(self, x):
        # Both choices in a single pallas_call (amortizes launch/DMA overhead).
        idx = jnp.array([0, 1], dtype=jnp.int32)
        out = param_mm_batched(self.w_stack, x, idx)
        return {"left": out[0], "right": out[1]}


if __name__ == "__main__":
    key = jax.random.PRNGKey(0)
    k_params, k_x = jax.random.split(key)

    module = MyModuleJax(k_params)

    # x must be (10, N) so that (5, 10) @ (10, N) works; pick N = 8 (small demo shape).
    x = jax.random.normal(k_x, (10, 8), dtype=jnp.float32)

    # --- Both outputs from ONE pallas_call (the batched fast path) ---
    outs = module.forward_all(x)
    jax.block_until_ready(outs)

    ref_left = module.params["left"] @ x
    ref_right = module.params["right"] @ x
    assert outs["left"].shape == (5, 8) and outs["right"].shape == (5, 8)
    assert jnp.allclose(outs["left"], ref_left, atol=1e-5, rtol=1e-5)
    assert jnp.allclose(outs["right"], ref_right, atol=1e-5, rtol=1e-5)

    # --- Torch-identical single-choice path (scalar-prefetch weight select) ---
    out_left = module.forward(x, "left")
    jax.block_until_ready(out_left)
    assert jnp.allclose(out_left, ref_left, atol=1e-5, rtol=1e-5)

    # --- Larger N exercises the N-grid / padding path (multiple 512-wide tiles) ---
    x_big = jax.random.normal(jax.random.PRNGKey(1), (10, 1152), dtype=jnp.float32)
    out_big = module.forward(x_big, "right")
    jax.block_until_ready(out_big)
    assert out_big.shape == (5, 1152)
    assert jnp.allclose(out_big, module.params["right"] @ x_big, atol=1e-4, rtol=1e-4)

    print("KERNEL_OK")
</pallas_src>

<mosaic_0001>
module attributes {stable_mosaic.version = 11 : i64} {
  func.func @_mm_kernel(%arg0: i32, %arg1: i32, %arg2: memref<2xi32, #tpu.memory_space<smem>>, %arg3: memref<1x5x10xf32, #tpu.memory_space<vmem>>, %arg4: memref<10x128xf32, #tpu.memory_space<vmem>>, %arg5: memref<1x5x128xf32, #tpu.memory_space<vmem>>) attributes {dimension_semantics = [#tpu.dimension_semantics<parallel>, #tpu.dimension_semantics<parallel>], iteration_bounds = array<i64: 2, 1>, scalar_prefetch = 1 : i64, scratch_operands = 0 : i64, tpu.core_type = #tpu.core_type<tc>, window_params = [{transform_indices = @transform_0, window_bounds = array<i64: 1, 5, 10>}, {transform_indices = @transform_1, window_bounds = array<i64: 10, 128>}, {transform_indices = @transform_2, window_bounds = array<i64: 1, 5, 128>}]} {
    %c0 = arith.constant 0 : index
    %c0_0 = arith.constant 0 : index
    %c0_1 = arith.constant 0 : index
    %0 = vector.load %arg3[%c0, %c0_0, %c0_1] : memref<1x5x10xf32, #tpu.memory_space<vmem>>, vector<1x5x10xf32>
    %1 = vector.shape_cast %0 : vector<1x5x10xf32> to vector<5x10xf32>
    %c0_2 = arith.constant 0 : index
    %c0_3 = arith.constant 0 : index
    %2 = vector.load %arg4[%c0_2, %c0_3] : memref<10x128xf32, #tpu.memory_space<vmem>>, vector<10x128xf32>
    %cst = arith.constant dense<0.000000e+00> : vector<5x128xf32>
    %3 = tpu.matmul %1, %2, %cst {dimension_numbers = #tpu.dot_dimension_numbers<[1], [0], [0], [1], [0, 0, 1, 1], [], []>} : vector<5x10xf32>, vector<10x128xf32>, vector<5x128xf32> -> vector<5x128xf32>
    %c0_4 = arith.constant 0 : index
    %c0_5 = arith.constant 0 : index
    %c0_6 = arith.constant 0 : index
    %4 = vector.load %arg5[%c0_4, %c0_5, %c0_6] : memref<1x5x128xf32, #tpu.memory_space<vmem>>, vector<1x5x128xf32>
    %5 = vector.shape_cast %4 : vector<1x5x128xf32> to vector<5x128xf32>
    %6 = vector.shape_cast %3 : vector<5x128xf32> to vector<1x5x128xf32>
    tpu.vector_store %arg5[%c0_4, %c0_5, %c0_6], %6 {strides = array<i32>} : memref<1x5x128xf32, #tpu.memory_space<vmem>>, vector<1x5x128xf32>,
    return
  }
  func.func @transform_0(%arg0: i32, %arg1: i32, %arg2: memref<2xi32, #tpu.memory_space<smem>>) -> (i32, i32, i32) {
    %0 = arith.index_cast %arg0 : i32 to index
    %1 = memref.load %arg2[%0] : memref<2xi32, #tpu.memory_space<smem>>
    %c0_i32 = arith.constant 0 : i32
    %c0_i32_0 = arith.constant 0 : i32
    %c0_i32_1 = arith.constant 0 : i32
    return %1, %c0_i32, %c0_i32_0 : i32, i32, i32
  }
  func.func @transform_1(%arg0: i32, %arg1: i32, %arg2: memref<2xi32, #tpu.memory_space<smem>>) -> (i32, i32) {
    %c0_i32 = arith.constant 0 : i32
    %c0_i32_0 = arith.constant 0 : i32
    return %c0_i32, %arg1 : i32, i32
  }
  func.func @transform_2(%arg0: i32, %arg1: i32, %arg2: memref<2xi32, #tpu.memory_space<smem>>) -> (i32, i32, i32) {
    %c0_i32 = arith.constant 0 : i32
    %c0_i32_0 = arith.constant 0 : i32
    return %arg0, %c0_i32, %arg1 : i32, i32, i32
  }
}

</mosaic_0001>

<llo_original>
// kernel: tpu_custom_call.1
$region0: #{tpu_custom_call.1}
  #allocation0 [shape = 'u32[]', space=smem, size = 0x4, offset = 0x4, fixed_abs, tag = 'smem constant byte address 0x4 - core index']
  #allocation1 [shape = 'u32[72,128]{1,0:T(1,128)}', space=vmem, size = 0x9000, scoped, tag = 'internal scratch']
  #allocation2 [shape = 's32[1]{0}', space=sflag, size = 0x4, scoped, tag = 'scoped memory for tpu_custom_call.1']
  #allocation3 [shape = 'u8[512]{0}', space=smem, size = 0x200, scoped, tag = 'prefetched SMEM operand 0']
  %s0 = inlined_call_operand.vmem [shape: s32[2], index: 0, kind: input, shape index: {}]
  %s1 = inlined_call_operand.vmem [shape: f32[2,5,10], index: 1, kind: input, shape index: {}]
  %s2 = inlined_call_operand.vmem [shape: f32[10,128], index: 2, kind: input, shape index: {}]
  %s3 = inlined_call_operand.vmem [shape: f32[2,5,128], index: 3, kind: output, shape index: {}]
  %s4 = sld [smem:[#allocation0]]
  $region41: #{tpu_custom_call.1} parent=0
    _
  %s6 = ssub.s32 1, %s4
  %s7 = scalar_select 0, %s6, %s4
  %s9 = sshll.u32 %s0, 4
  %s10 = int_to_ptr.vmem [resolvable:$true] %s9
  %12 = dma.vmem_to_smem %s10, 16, [#allocation3], [#allocation2]
  %14 = dma.done [#allocation2], 16
  %15 = sfence
  loop: start=0, step=1, limit=4
  $region2: #{tpu_custom_call.1} parent=0 // loop_pre_header
    _
  $region3: #{tpu_custom_call.1} parent=0 // loop_header
    %s17 = sphi 0, %s21
    %p18 = scmp.ge.s32.totalorder %s17, 4
    %s24 = sphi 0, %s36
    %s25 = sphi 0, %s32
    %s26 = sphi 0, %s24
    %s27 = sphi 0, %s25
    %s28 = sphi 0, %s26
    %s29 = sphi 0, %s27
    %s41 = sphi 0, %s43
    %s44 = sphi 0, %s41
    %s45 = sphi 0, %s44
    %s61 = sphi 0, %s45
    %s67 = sphi 0, %s69
    %s70 = sphi 0, %s67
    %s71 = sphi 0, %s70
    %s87 = sphi 0, %s71
    %s95 = sphi 0, %s97
    %s98 = sphi 0, %s95
    %s99 = sphi 0, %s98
    %s115 = sphi 0, %s99
  $region4: #{tpu_custom_call.1} parent=0 // loop_header_branch
    %20 = sbr.rel (%p18) target = $region8
  $region5: #{tpu_custom_call.1} parent=0 // loop_body
    %s22 = ssub.s32 %s17, 1
    %s23 = ssub.s32 %s17, 2
    %s30 = sadd.s32 1, %s25
    %p31 = scmp.ge.s32.totalorder %s30, 1
    %s32 = scalar_select %p31, 0, %s30
    %s33 = sadd.s32 1, %s24
    %s34 = scalar_select %p31, %s33, %s24
    %p35 = scmp.ge.s32.totalorder %s34, 2
    %s36 = scalar_select %p35, 0, %s34
    %s37 = sld [smem:[#allocation3 + %s24]]
    %s38 = sld [smem:[#allocation3 + %s36]]
    %s39 = ssub.s32 %s37, %s38
    %p40 = scmp.eq.s32.totalorder %s39, 0
    %s42 = sadd.s32 %s41, 1
    %s43 = scalar_select %p40, %s41, %s42
    %p46 = pneg %p40
    %p47 = scmp.eq.s32.totalorder %s17, 1
    %p48 = por %p46, %p47
    %p49 = scmp.ne.s32.totalorder %s41, %s44
    %p50 = scmp.eq.s32.totalorder %s17, 0
    %p51 = por %p49, %p50
    %p52 = scmp.ne.s32.totalorder %s41, %s44
    %p53 = scmp.eq.s32.totalorder %s22, 1
    %p54 = por %p52, %p53
    %p55 = scmp.ne.s32.totalorder %s44, %s45
    %p56 = scmp.eq.s32.totalorder %s22, 0
    %p57 = por %p55, %p56
    %p58 = scmp.ne.s32.totalorder %s44, %s45
    %p59 = scmp.eq.s32.totalorder %s23, 1
    %p60 = por %p58, %p59
    %p62 = scmp.ne.s32.totalorder %s45, %s61
    %p63 = scmp.eq.s32.totalorder %s23, 0
    %p64 = por %p62, %p63
    %s65 = ssub.s32 %s25, %s32
    %p66 = scmp.eq.s32.totalorder %s65, 0
    %s68 = sadd.s32 %s67, 1
    %s69 = scalar_select %p66, %s67, %s68
    %p72 = pneg %p66
    %p73 = scmp.eq.s32.totalorder %s17, 1
    %p74 = por %p72, %p73
    %p75 = scmp.ne.s32.totalorder %s67, %s70
    %p76 = scmp.eq.s32.totalorder %s17, 0
    %p77 = por %p75, %p76
    %p78 = scmp.ne.s32.totalorder %s67, %s70
    %p79 = scmp.eq.s32.totalorder %s22, 1
    %p80 = por %p78, %p79
    %p81 = scmp.ne.s32.totalorder %s70, %s71
    %p82 = scmp.eq.s32.totalorder %s22, 0
    %p83 = por %p81, %p82
    %p84 = scmp.ne.s32.totalorder %s70, %s71
    %p85 = scmp.eq.s32.totalorder %s23, 1
    %p86 = por %p84, %p85
    %p88 = scmp.ne.s32.totalorder %s71, %s87
    %p89 = scmp.eq.s32.totalorder %s23, 0
    %p90 = por %p88, %p89
    %s91 = ssub.s32 %s24, %s36
    %s92 = ssub.s32 %s25, %s32
    %s93 = sor.u32 %s91, %s92
    %p94 = scmp.eq.s32.totalorder %s93, 0
    %s96 = sadd.s32 %s95, 1
    %s97 = scalar_select %p94, %s95, %s96
    %p100 = pneg %p94
    %p101 = scmp.eq.s32.totalorder %s17, 1
    %p102 = por %p100, %p101
    %p103 = scmp.ne.s32.totalorder %s95, %s98
    %p104 = scmp.eq.s32.totalorder %s17, 0
    %p105 = por %p103, %p104
    %p106 = scmp.ne.s32.totalorder %s95, %s98
    %p107 = scmp.eq.s32.totalorder %s22, 1
    %p108 = por %p106, %p107
    %p109 = scmp.ne.s32.totalorder %s98, %s99
    %p110 = scmp.eq.s32.totalorder %s22, 0
    %p111 = por %p109, %p110
    %p112 = scmp.ne.s32.totalorder %s98, %s99
    %p113 = scmp.eq.s32.totalorder %s23, 1
    %p114 = por %p112, %p113
    %p116 = scmp.ne.s32.totalorder %s99, %s115
    %p117 = scmp.eq.s32.totalorder %s23, 0
    %p118 = por %p116, %p117
    %p119 = scmp.le.s32.totalorder 1, %s17
    %p120 = scmp.lt.s32.totalorder %s17, 3
    %p121 = pnand %p119, %p120
    %p122 = pneg %p121
    // Predicated region
    $region9: #{tpu_custom_call.1} parent=5 // pred_check
      _
    $region10: #{tpu_custom_call.1} parent=5 // pred_check_branch
      %124 = sbr.rel (%p121) target = $region12
    $region11: #{tpu_custom_call.1} parent=5 // pred_region
      %s125 = ssub.s32 %s17, 1
      // Predicated region
      $region13: #{tpu_custom_call.1} parent=11 // pred_check
        %p126 = pneg %p83
      $region14: #{tpu_custom_call.1} parent=11 // pred_check_branch
        %128 = sbr.rel (%p126) target = $region16
      $region15: #{tpu_custom_call.1} parent=11 // pred_region
        %p129 = scmp.lt.s32.totalorder %s27, 0
        %s130 = scalar_select %p129, %s27, 0
        %s131 = smul.addr %s130, 8
        %s132 = scalar_lea.vmem %s2, %s131
      $region16: #{tpu_custom_call.1} parent=11 // pred_fallthru
        _
    $region12: #{tpu_custom_call.1} parent=5 // pred_fallthru
      _
    %p133 = scmp.lt.s32.totalorder %s17, 2
    // Predicated region
    $region17: #{tpu_custom_call.1} parent=5 // pred_check
      %p134 = pneg %p133
    $region18: #{tpu_custom_call.1} parent=5 // pred_check_branch
      %136 = sbr.rel (%p134) target = $region20
    $region19: #{tpu_custom_call.1} parent=5 // pred_region
      // Predicated region
      $region21: #{tpu_custom_call.1} parent=19 // pred_check
        %p137 = pneg %p51
      $region22: #{tpu_custom_call.1} parent=19 // pred_check_branch
        %139 = sbr.rel (%p137) target = $region24
      $region23: #{tpu_custom_call.1} parent=19 // pred_region
        %s140 = sld [smem:[#allocation3 + %s24]]
        %p141 = scmp.lt.s32.totalorder %s140, 1
        %s142 = scalar_select %p141, %s140, 1
        %s143 = smul.addr %s142, 8
        %s144 = scalar_lea.vmem %s1, %s143
        %s145 = sld [smem:[#allocation3 + %s24]]
      $region24: #{tpu_custom_call.1} parent=19 // pred_fallthru
        _
    $region20: #{tpu_custom_call.1} parent=5 // pred_fallthru
      _
    %p146 = scmp.le.s32.totalorder 1, %s17
    %p147 = scmp.lt.s32.totalorder %s17, 3
    %p148 = pnand %p146, %p147
    %p149 = pneg %p148
    // Predicated region
    $region25: #{tpu_custom_call.1} parent=5 // pred_check
      _
    $region26: #{tpu_custom_call.1} parent=5 // pred_check_branch
      %151 = sbr.rel (%p148) target = $region28
    $region27: #{tpu_custom_call.1} parent=5 // pred_region
      %s152 = ssub.s32 %s17, 1
      %s153 = sld [smem:[#allocation3 + %s26]]
      %p154 = scmp.lt.s32.totalorder %s153, 1
      %s155 = scalar_select %p154, %s153, 1
      %s156 = smul.addr %s155, 8
      %s157 = scalar_lea.vmem %s1, %s156
      %p158 = pneg %p57
      %p159 = pneg %p54
      %p160 = scmp.lt.s32.totalorder %s27, 0
      %s161 = scalar_select %p160, %s27, 0
      %s162 = smul.addr %s161, 8
      %s163 = scalar_lea.vmem %s2, %s162
      %p164 = pneg %p83
      %p165 = pneg %p80
      %p166 = pneg %p111
      %p167 = pneg %p108
      %p168 = scmp.lt.s32.totalorder %s26, 1
      %s169 = scalar_select %p168, %s26, 1
      %p170 = scmp.lt.s32.totalorder %s27, 0
      %s171 = scalar_select %p170, %s27, 0
      %s172 = sadd.s32 %s171, %s169
      %s173 = smul.addr %s172, 8
      %s174 = scalar_lea.vmem %s3, %s173
      %s175 = sld [smem:[#allocation3 + %s26]]
      %p176 = scmp.lt.s32.totalorder %s175, 1
      %s177 = scalar_select %p176, %s175, 1
      %s178 = smul.addr %s177, 8
      %s179 = scalar_lea.vmem %s1, %s178
      %s180 = sld [smem:[#allocation3 + %s26]]
      %p181 = scmp.lt.s32.totalorder %s27, 0
      %s182 = scalar_select %p181, %s27, 0
      %s183 = smul.addr %s182, 8
      %s184 = scalar_lea.vmem %s2, %s183
      %p185 = scmp.lt.s32.totalorder %s26, 1
      %s186 = scalar_select %p185, %s26, 1
      %p187 = scmp.lt.s32.totalorder %s27, 0
      %s188 = scalar_select %p187, %s27, 0
      %s189 = sadd.s32 %s188, %s186
      %s190 = smul.addr %s189, 8
      %s191 = scalar_lea.vmem %s3, %s190
      %v192 = vld [vmem:[%s179] sm:$0x1f]
      %v193 = vld [vmem:[%s184] sm:$0xff]
      %v194 = vld [vmem:[%s184 + $0x8] sm:$0x3]
      %vm195 = vcmask 80896
      %v197 = vsel %vm195, %v192, 0
      %vm199 = vcmask 1041408
      %v201 = vsel %vm199, %v194, 0
      %203 = vmatpush.msra.mxu0 0.0
      %204 = vmatpush.msra.mxu0 0.0
      %205 = vmatpush.msra.mxu0 0.0
      %206 = vmatpush.msra.mxu0 0.0
      %207 = vmatpush.msra.mxu0 0.0
      %208 = vmatpush.msra.mxu0 0.0
      %209 = vmatpush.msra.mxu0 0.0
      %210 = vmatpush.msra.mxu0 0.0
      %211 = vmatpush.msra.mxu0 0.0
      %212 = vmatpush.msra.mxu0 0.0
      %213 = vmatpush.msra.mxu0 0.0
      %214 = vmatpush.msra.mxu0 0.0
      %215 = vmatpush.msra.mxu0 0.0
      %216 = vmatpush.msra.mxu0 0.0
      %217 = vmatpush.msra.mxu0 %v201
      %218 = vmatpush.msra.mxu0 %v193
      %219 = vmatmul.f32.gmra.mxu0 %v197
      %v220 = vpop.f32.mrf.mxu0
      %v221 = vadd.f32 0.0, %v220
      %222 = vdwg.mxu0
      %223 = vst [vmem:[%s191] sm:$0x1f] %v221
      %p224 = scmp.lt.s32.totalorder %s26, 1
      %s225 = scalar_select %p224, %s26, 1
      %p226 = scmp.lt.s32.totalorder %s27, 0
      %s227 = scalar_select %p226, %s27, 0
      %s228 = sadd.s32 %s227, %s225
      %s229 = smul.addr %s228, 8
      %s230 = scalar_lea.vmem %s3, %s229
      // Predicated region
      $region29: #{tpu_custom_call.1} parent=27 // pred_check
        %p231 = pneg %p108
      $region30: #{tpu_custom_call.1} parent=27 // pred_check_branch
        %233 = sbr.rel (%p231) target = $region32
      $region31: #{tpu_custom_call.1} parent=27 // pred_region
        _
      $region32: #{tpu_custom_call.1} parent=27 // pred_fallthru
        _
    $region28: #{tpu_custom_call.1} parent=5 // pred_fallthru
      _
    %p234 = scmp.le.s32.totalorder 2, %s17
    // Predicated region
    $region33: #{tpu_custom_call.1} parent=5 // pred_check
      %p235 = pneg %p234
    $region34: #{tpu_custom_call.1} parent=5 // pred_check_branch
      %237 = sbr.rel (%p235) target = $region36
    $region35: #{tpu_custom_call.1} parent=5 // pred_region
      %s238 = ssub.s32 %s17, 2
      // Predicated region
      $region37: #{tpu_custom_call.1} parent=35 // pred_check
        %p239 = pneg %p114
      $region38: #{tpu_custom_call.1} parent=35 // pred_check_branch
        %241 = sbr.rel (%p239) target = $region40
      $region39: #{tpu_custom_call.1} parent=35 // pred_region
        %p242 = scmp.lt.s32.totalorder %s28, 1
        %s243 = scalar_select %p242, %s28, 1
        %p244 = scmp.lt.s32.totalorder %s29, 0
        %s245 = scalar_select %p244, %s29, 0
        %s246 = sadd.s32 %s245, %s243
        %s247 = smul.addr %s246, 8
        %s248 = scalar_lea.vmem %s3, %s247
      $region40: #{tpu_custom_call.1} parent=35 // pred_fallthru
        _
    $region36: #{tpu_custom_call.1} parent=5 // pred_fallthru
      _
  $region6: #{tpu_custom_call.1} parent=0 // loop_footer
    %s21 = sadd.s32 1, %s17
  $region7: #{tpu_custom_call.1} parent=0 // loop_footer_branch
    %16 = sbr.rel target = $region3
  $region8: #{tpu_custom_call.1} parent=0 // loop_exit
    _

</llo_original>
